<compile_context>
chip_gen: v7x
topology: tpu7x:2x2x1
jax: 0.10.0
libtpu: 0.0.40
codegen_flags: <defaults>
</compile_context>

<pallas_src>
import functools

import jax
import jax.numpy as jnp
from jax import lax
from jax.experimental import pallas as pl
from jax.experimental.pallas import tpu as pltpu


_VMEM_BUDGET_BYTES = 24 * 2**20          # conservative: fits v7x's 32 MiB scoped default
_VMEM_LIMIT_CAP_BYTES = 48 * 2**20       # stay well under v7x's 64 MiB physical VMEM
_RESIDENT_CENTERS_MAX_BYTES = 8 * 2**20  # threshold for keeping (C, D) resident in VMEM


def _round_up(x, m):
    return (x + m - 1) // m * m


def _row_losses(f, cb, normalize_features, normalize_centers):
    """Per-row CenterLoss given features f and gathered centers cb, both (tb, D) f32."""
    # F.normalize(p=2, dim=1): x / max(||x||, 1e-12) == x * rsqrt(max(||x||^2, 1e-24))
    eps2 = jnp.float32(1e-24)
    if normalize_features:
        f = f * lax.rsqrt(jnp.maximum(jnp.sum(f * f, axis=1, keepdims=True), eps2))
    if normalize_centers:
        cb = cb * lax.rsqrt(jnp.maximum(jnp.sum(cb * cb, axis=1, keepdims=True), eps2))
    if normalize_features and normalize_centers:
        return 1.0 - jnp.sum(f * cb, axis=1, keepdims=True)
    d = f - cb
    return jnp.sum(d * d, axis=1, keepdims=True)


# ---------------------------------------------------------------------------
# Path A: centers resident in VMEM (small / moderate C*D).  No cross-step
# state -> batch grid axis can be "parallel" (v7x megacore).
# ---------------------------------------------------------------------------
def _center_loss_resident_kernel(feat_ref, lab_ref, cent_ref, out_ref, *,
                                 normalize_centers, normalize_features):
    f = feat_ref[...].astype(jnp.float32)        # (tb, D)
    labs = lab_ref[...]                          # (tb, 1) int32
    c = cent_ref[...].astype(jnp.float32)        # (C, D), fetched once / resident

    tb = f.shape[0]
    num_classes = c.shape[0]

    # centers[labels] as an exact one-hot gather on the (idle) MXU.
    onehot = (labs == lax.broadcasted_iota(jnp.int32, (tb, num_classes), 1)
              ).astype(jnp.float32)
    cb = jnp.dot(onehot, c, preferred_element_type=jnp.float32)   # (tb, D)

    out_ref[...] = _row_losses(f, cb, normalize_features, normalize_centers)


# ---------------------------------------------------------------------------
# Path B: centers stay in HBM; per-row DMA gather double-buffered across grid
# steps with one shared DMA semaphore per slot.
# ---------------------------------------------------------------------------
def _center_loss_gather_kernel(lab_smem, feat_ref, cent_hbm, out_ref,
                               gbuf, sems, *, tb,
                               normalize_centers, normalize_features):
    i = pl.program_id(0)
    n = pl.num_programs(0)

    def issue(tile, slot):
        base = tile * tb
        for r in range(tb):                      # static unroll (tb capped on this path)
            idx = lab_smem[base + r]             # scalar read from SMEM (before any wait)
            pltpu.make_async_copy(
                cent_hbm.at[pl.ds(idx, 1), :],   # (1, D) row in HBM
                gbuf.at[slot, pl.ds(r, 1), :],   # (1, D) row in the slot buffer
                sems.at[slot],
            ).start()

    def wait_all(slot):
        # Shared per-slot semaphore: each wait accounts for exactly one row's bytes,
        # matching the started (1, D) copies.
        for r in range(tb):
            pltpu.make_async_copy(
                cent_hbm.at[pl.ds(0, 1), :],     # descriptor used for byte-count only
                gbuf.at[slot, pl.ds(r, 1), :],
                sems.at[slot],
            ).wait()

    @pl.when(i == 0)
    def _():
        issue(0, 0)                              # prime slot 0

    # Prefetch next tile's center rows into the other slot before consuming
    # the current one (overlaps with this step's compute + next feature DMA).
    @pl.when(i + 1 < n)
    def _():
        issue(i + 1, (i + 1) % 2)

    cur = i % 2
    wait_all(cur)                                # DMAs were issued a full step ago

    f = feat_ref[...].astype(jnp.float32)        # (tb, D)
    cb = gbuf[cur].astype(jnp.float32)           # (tb, D) gathered center rows
    out_ref[...] = _row_losses(f, cb, normalize_features, normalize_centers)


# ---------------------------------------------------------------------------
# Wrapper
# ---------------------------------------------------------------------------
def _vmem_estimate(tb, D, C, feat_bytes, cent_bytes, resident):
    d_pad = _round_up(D, 128)                    # lane padding
    c_lanes = _round_up(C, 128)
    e = 2 * tb * d_pad * feat_bytes              # double-buffered feature tiles
    e += 4 * tb * d_pad * 4                      # f32 temporaries (f, cb, products)
    e += 2 * tb * 4                              # per-row loss output blocks
    if resident:
        e += _round_up(C, 8) * d_pad * (cent_bytes + 4)   # resident centers (+ f32 copy)
        e += 2 * tb * c_lanes * 4                         # one-hot / sims temporaries
    else:
        e += 2 * tb * d_pad * cent_bytes                  # (2, tb, D) gather buffer
    return e


def _pick_tb(B, D, C, feat_bytes, cent_bytes, resident):
    cap = 1024 if resident else 256              # gather path unrolls its DMA loops
    tb = min(cap, _round_up(B, 8))
    while tb > 8 and _vmem_estimate(tb, D, C, feat_bytes, cent_bytes,
                                    resident) > _VMEM_BUDGET_BYTES:
        tb = max(8, _round_up(tb // 2, 8))
    return tb


def center_loss(features, labels, centers, *,
                normalize_centers=True, normalize_features=True,
                tb=None, force_gather_path=False):
    """Pallas CenterLoss forward.

    features: (B, D) float
    labels:   (B,)   int
    centers:  (C, D) float (the module parameter)
    returns:  scalar float32 loss
    """
    B, D = features.shape
    C, Dc = centers.shape
    assert Dc == D, (centers.shape, features.shape)

    # Keep the row gather in bounds (DMA OOB is a hard fault on TPU).
    labs = jnp.clip(labels.astype(jnp.int32), 0, C - 1)

    feat_bytes = jnp.dtype(features.dtype).itemsize
    cent_bytes = jnp.dtype(centers.dtype).itemsize
    d_pad = _round_up(D, 128)

    resident = (not force_gather_path) and (
        _round_up(C, 8) * d_pad * (cent_bytes + 4) <= _RESIDENT_CENTERS_MAX_BYTES)

    if tb is None:
        tb = _pick_tb(B, D, C, feat_bytes, cent_bytes, resident)
    assert tb % 8 == 0 and tb > 0
    est = _vmem_estimate(tb, D, C, feat_bytes, cent_bytes, resident)
    vmem_limit = int(min(_VMEM_LIMIT_CAP_BYTES, max(32 * 2**20, 2 * est)))

    Bp = _round_up(B, tb)
    feats = features
    if Bp != B:
        feats = jnp.pad(feats, ((0, Bp - B), (0, 0)))
        labs = jnp.pad(labs, (0, Bp - B))        # pad label 0 (in range); rows dropped below
    num_tiles = Bp // tb

    if resident:
        kernel = functools.partial(
            _center_loss_resident_kernel,
            normalize_centers=normalize_centers,
            normalize_features=normalize_features)
        grid_spec = pltpu.PrefetchScalarGridSpec(
            num_scalar_prefetch=0,
            grid=(num_tiles,),
            in_specs=[
                pl.BlockSpec((tb, D), lambda i: (i, 0)),   # feature tile (pipelined)
                pl.BlockSpec((tb, 1), lambda i: (i, 0)),   # label tile
                pl.BlockSpec((C, D), lambda i: (0, 0)),    # centers: fetched once, resident
            ],
            out_specs=pl.BlockSpec((tb, 1), lambda i: (i, 0)),
        )
        rows = pl.pallas_call(
            kernel,
            out_shape=jax.ShapeDtypeStruct((Bp, 1), jnp.float32),
            grid_spec=grid_spec,
            compiler_params=pltpu.CompilerParams(
                dimension_semantics=("parallel",),         # no cross-step state
                vmem_limit_bytes=vmem_limit),
        )(feats, labs.reshape(Bp, 1), centers)
    else:
        kernel = functools.partial(
            _center_loss_gather_kernel,
            tb=tb,
            normalize_centers=normalize_centers,
            normalize_features=normalize_features)
        grid_spec = pltpu.PrefetchScalarGridSpec(
            num_scalar_prefetch=1,                         # labels -> SMEM (DMA addressing)
            grid=(num_tiles,),
            in_specs=[
                pl.BlockSpec((tb, D), lambda i, lab: (i, 0)),  # feature tile (pipelined)
                pl.BlockSpec(memory_space=pl.ANY),             # centers stay in HBM
            ],
            out_specs=pl.BlockSpec((tb, 1), lambda i, lab: (i, 0)),
            scratch_shapes=[
                pltpu.VMEM((2, tb, D), centers.dtype),     # double-buffered gathered rows
                pltpu.SemaphoreType.DMA((2,)),             # one shared sem per slot
            ],
        )
        rows = pl.pallas_call(
            kernel,
            out_shape=jax.ShapeDtypeStruct((Bp, 1), jnp.float32),
            grid_spec=grid_spec,
            compiler_params=pltpu.CompilerParams(
                dimension_semantics=("arbitrary",),        # cross-step gather prefetch
                vmem_limit_bytes=vmem_limit),
        )(labs, feats, centers)

    # Tiny final reduction outside the kernel (per-row partials -> sum / B).
    return jnp.sum(rows[:B, 0]) / jnp.float32(B)


def _reference_center_loss(features, labels, centers,
                           normalize_centers=True, normalize_features=True):
    f = features.astype(jnp.float32)
    c = centers.astype(jnp.float32)
    if normalize_features:
        f = f / jnp.maximum(jnp.linalg.norm(f, axis=1, keepdims=True), 1e-12)
    if normalize_centers:
        c = c / jnp.maximum(jnp.linalg.norm(c, axis=1, keepdims=True), 1e-12)
    cb = c[labels]
    if normalize_features and normalize_centers:
        dist = 1.0 - jnp.sum(f * cb, axis=1)
    else:
        dist = jnp.sum((f - cb) ** 2, axis=1)
    return jnp.mean(dist)


if __name__ == "__main__":
    key = jax.random.PRNGKey(0)

    # Case 1: module-like small shapes; resident-centers path, single tile.
    C1, D1, B1 = 16, 32, 8
    k1, k2, k3, key = jax.random.split(key, 4)
    feats1 = jax.random.normal(k1, (B1, D1), dtype=jnp.float32)
    cents1 = jax.random.normal(k2, (C1, D1), dtype=jnp.float32) * 0.01
    labs1 = jax.random.randint(k3, (B1,), 0, C1, dtype=jnp.int32)
    loss1 = jax.block_until_ready(center_loss(feats1, labs1, cents1))
    ref1 = _reference_center_loss(feats1, labs1, cents1)
    assert jnp.allclose(loss1, ref1, atol=1e-5, rtol=1e-5), (loss1, ref1)

    # Case 2: resident path, multi-tile grid + padded tail (B not a tile multiple).
    C2, D2, B2 = 64, 48, 20
    k1, k2, k3, key = jax.random.split(key, 4)
    feats2 = jax.random.normal(k1, (B2, D2), dtype=jnp.float32)
    cents2 = jax.random.normal(k2, (C2, D2), dtype=jnp.float32) * 0.01
    labs2 = jax.random.randint(k3, (B2,), 0, C2, dtype=jnp.int32)
    loss2 = jax.block_until_ready(center_loss(feats2, labs2, cents2, tb=8))
    ref2 = _reference_center_loss(feats2, labs2, cents2)
    assert jnp.allclose(loss2, ref2, atol=1e-5, rtol=1e-5), (loss2, ref2)

    # Case 3: un-normalized branch (squared euclidean distance path).
    loss3 = jax.block_until_ready(
        center_loss(feats2, labs2, cents2, tb=8,
                    normalize_centers=False, normalize_features=False))
    ref3 = _reference_center_loss(feats2, labs2, cents2,
                                  normalize_centers=False,
                                  normalize_features=False)
    assert jnp.allclose(loss3, ref3, atol=1e-5, rtol=1e-5), (loss3, ref3)

    # Case 4: force the HBM-gather fallback (double-buffered per-row DMA path).
    loss4 = jax.block_until_ready(
        center_loss(feats2, labs2, cents2, tb=8, force_gather_path=True))
    assert jnp.allclose(loss4, ref2, atol=1e-5, rtol=1e-5), (loss4, ref2)

    print("KERNEL_OK")
</pallas_src>

<mosaic_0001>
module attributes {stable_mosaic.version = 11 : i64} {
  func.func @_center_loss_resident_kernel(%arg0: i32, %arg1: memref<8x32xf32, #tpu.memory_space<vmem>>, %arg2: memref<8x1xi32, #tpu.memory_space<vmem>>, %arg3: memref<16x32xf32, #tpu.memory_space<vmem>>, %arg4: memref<8x1xf32, #tpu.memory_space<vmem>>) attributes {dimension_semantics = [#tpu.dimension_semantics<parallel>], iteration_bounds = array<i64: 1>, scalar_prefetch = 0 : i64, scratch_operands = 0 : i64, tpu.core_type = #tpu.core_type<tc>, window_params = [{transform_indices = @transform_0, window_bounds = array<i64: 8, 32>}, {transform_indices = @transform_1, window_bounds = array<i64: 8, 1>}, {pipeline_mode = #tpu.pipeline_mode<synchronous>, transform_indices = @transform_2, window_bounds = array<i64: 16, 32>}, {transform_indices = @transform_3, window_bounds = array<i64: 8, 1>}]} {
    %c0 = arith.constant 0 : index
    %c0_0 = arith.constant 0 : index
    %0 = vector.load %arg1[%c0, %c0_0] : memref<8x32xf32, #tpu.memory_space<vmem>>, vector<8x32xf32>
    %c0_1 = arith.constant 0 : index
    %c0_2 = arith.constant 0 : index
    %1 = vector.load %arg2[%c0_1, %c0_2] : memref<8x1xi32, #tpu.memory_space<vmem>>, vector<8x1xi32>
    %c0_3 = arith.constant 0 : index
    %c0_4 = arith.constant 0 : index
    %2 = vector.load %arg3[%c0_3, %c0_4] : memref<16x32xf32, #tpu.memory_space<vmem>>, vector<16x32xf32>
    %3 = tpu.iota {dimensions = array<i32: 1>} : vector<8x16xi32>
    %4 = vector.broadcast %1 : vector<8x1xi32> to vector<8x16xi32>
    %5 = arith.cmpi eq, %4, %3 : vector<8x16xi32>
    %6 = arith.extui %5 : vector<8x16xi1> to vector<8x16xi32>
    %7 = arith.sitofp %6 : vector<8x16xi32> to vector<8x16xf32>
    %cst = arith.constant dense<0.000000e+00> : vector<8x32xf32>
    %8 = tpu.matmul %7, %2, %cst {dimension_numbers = #tpu.dot_dimension_numbers<[1], [0], [0], [1], [0, 0, 1, 1], [], []>} : vector<8x16xf32>, vector<16x32xf32>, vector<8x32xf32> -> vector<8x32xf32>
    %9 = arith.mulf %0, %0 : vector<8x32xf32>
    %cst_5 = arith.constant dense<0.000000e+00> : vector<8xf32>
    %10 = vector.multi_reduction <add>, %9, %cst_5 [1] : vector<8x32xf32> to vector<8xf32>
    %11 = vector.shape_cast %10 : vector<8xf32> to vector<8x1xf32>
    %cst_6 = arith.constant 1.000000e-24 : f32
    %12 = vector.broadcast %cst_6 : f32 to vector<8x1xf32>
    %13 = arith.maximumf %11, %12 : vector<8x1xf32>
    %14 = math.rsqrt %13 : vector<8x1xf32>
    %15 = vector.broadcast %14 : vector<8x1xf32> to vector<8x32xf32>
    %16 = arith.mulf %0, %15 : vector<8x32xf32>
    %17 = arith.mulf %8, %8 : vector<8x32xf32>
    %cst_7 = arith.constant dense<0.000000e+00> : vector<8xf32>
    %18 = vector.multi_reduction <add>, %17, %cst_7 [1] : vector<8x32xf32> to vector<8xf32>
    %19 = vector.shape_cast %18 : vector<8xf32> to vector<8x1xf32>
    %cst_8 = arith.constant 1.000000e-24 : f32
    %20 = vector.broadcast %cst_8 : f32 to vector<8x1xf32>
    %21 = arith.maximumf %19, %20 : vector<8x1xf32>
    %22 = math.rsqrt %21 : vector<8x1xf32>
    %23 = vector.broadcast %22 : vector<8x1xf32> to vector<8x32xf32>
    %24 = arith.mulf %8, %23 : vector<8x32xf32>
    %25 = arith.mulf %16, %24 : vector<8x32xf32>
    %cst_9 = arith.constant dense<0.000000e+00> : vector<8xf32>
    %26 = vector.multi_reduction <add>, %25, %cst_9 [1] : vector<8x32xf32> to vector<8xf32>
    %27 = vector.shape_cast %26 : vector<8xf32> to vector<8x1xf32>
    %cst_10 = arith.constant 1.000000e+00 : f32
    %28 = vector.broadcast %cst_10 : f32 to vector<8x1xf32>
    %29 = arith.subf %28, %27 : vector<8x1xf32>
    %c0_11 = arith.constant 0 : index
    %c0_12 = arith.constant 0 : index
    %30 = vector.load %arg4[%c0_11, %c0_12] : memref<8x1xf32, #tpu.memory_space<vmem>>, vector<8x1xf32>
    tpu.vector_store %arg4[%c0_11, %c0_12], %29 {strides = array<i32>} : memref<8x1xf32, #tpu.memory_space<vmem>>, vector<8x1xf32>,
    return
  }
  func.func @transform_0(%arg0: i32) -> (i32, i32) {
    %c0_i32 = arith.constant 0 : i32
    %c0_i32_0 = arith.constant 0 : i32
    return %arg0, %c0_i32 : i32, i32
  }
  func.func @transform_1(%arg0: i32) -> (i32, i32) {
    %c0_i32 = arith.constant 0 : i32
    %c0_i32_0 = arith.constant 0 : i32
    return %arg0, %c0_i32 : i32, i32
  }
  func.func @transform_2(%arg0: i32) -> (i32, i32) {
    %c0_i32 = arith.constant 0 : i32
    %c0_i32_0 = arith.constant 0 : i32
    %c0_i32_1 = arith.constant 0 : i32
    return %c0_i32, %c0_i32_0 : i32, i32
  }
  func.func @transform_3(%arg0: i32) -> (i32, i32) {
    %c0_i32 = arith.constant 0 : i32
    %c0_i32_0 = arith.constant 0 : i32
    return %arg0, %c0_i32 : i32, i32
  }
}

</mosaic_0001>

<llo_original>
// kernel: tpu_custom_call.1
$region0: #{tpu_custom_call.1}
  #allocation0 [shape = 'u32[]', space=smem, size = 0x4, offset = 0x4, fixed_abs, tag = 'smem constant byte address 0x4 - core index']
  #allocation1 [shape = 'u32[144,128]{1,0:T(1,128)}', space=vmem, size = 0x12000, scoped, tag = 'internal scratch']
  %s0 = inlined_call_operand.hbm [shape: f32[8,32], index: 0, kind: input, shape index: {}]
  %s1 = inlined_call_operand.vmem [shape: s32[8,1], index: 1, kind: input, shape index: {}]
  %s2 = inlined_call_operand.vmem [shape: f32[16,32], index: 2, kind: input, shape index: {}]
  %s3 = inlined_call_operand.vmem [shape: f32[8,1], index: 3, kind: output, shape index: {}]
  %s4 = sld [smem:[#allocation0]]
  $region26: #{tpu_custom_call.1} parent=0
    _
  %s6 = ssub.s32 1, %s4
  %s7 = scalar_select 0, %s6, %s4
  $region1: #{tpu_custom_call.1} parent=0
    #allocation2 [shape = 'u8[4096]{0}', space=vmem, size = 0x1000, scoped, tag = 'input window, operand 0, single buffered']
    #allocation3 [shape = 's32[1]{0}', space=sflag, size = 0x4, scoped, tag = 'scoped memory for tpu_custom_call.1']
    %8 = vsyncpa [#allocation3], 0
    // Predicated region
    $region2: #{tpu_custom_call.1} parent=1 // pred_check
      _
    $region3: #{tpu_custom_call.1} parent=1 // pred_check_branch
      %10 = sbr.rel (0) target = $region5
    $region4: #{tpu_custom_call.1} parent=1 // pred_region
      %s12 = ssub.s32 128, 128
      %13 = vsyncadd [#allocation3], %s12
      %s15 = sshll.u32 [#allocation2], 4
      %s16 = int_to_ptr.vmem [resolvable:$true] %s15
      %18 = dma.hbm_to_vmem [thread:$0]  %s0, 128, %s16, [#allocation3]
    $region5: #{tpu_custom_call.1} parent=1 // pred_fallthru
      _
    // Predicated region
    $region6: #{tpu_custom_call.1} parent=1 // pred_check
      _
    $region7: #{tpu_custom_call.1} parent=1 // pred_check_branch
      %20 = sbr.rel (0) target = $region9
    $region8: #{tpu_custom_call.1} parent=1 // pred_region
      _
    $region9: #{tpu_custom_call.1} parent=1 // pred_fallthru
      _
    // Predicated region
    $region10: #{tpu_custom_call.1} parent=1 // pred_check
      _
    $region11: #{tpu_custom_call.1} parent=1 // pred_check_branch
      %22 = sbr.rel (0) target = $region13
    $region12: #{tpu_custom_call.1} parent=1 // pred_region
      _
    $region13: #{tpu_custom_call.1} parent=1 // pred_fallthru
      _
    // Predicated region
    $region14: #{tpu_custom_call.1} parent=1 // pred_check
      _
    $region15: #{tpu_custom_call.1} parent=1 // pred_check_branch
      %24 = sbr.rel (0) target = $region17
    $region16: #{tpu_custom_call.1} parent=1 // pred_region
      %25 = dma.done [#allocation3], 128
    $region17: #{tpu_custom_call.1} parent=1 // pred_fallthru
      _
    %v26 = vld [vmem:[#allocation2] sm:$0xff]
    %v27 = vld [vmem:[%s1] sm:$0xff]
    %v28 = vld [vmem:[%s2] sm:$0xff]
    %v29 = vld [vmem:[%s2 + $0x8] sm:$0xff]
    %v30 = vlaneseq
    %v31 = vand.u32 %v30, 127
    %32 = vset.pattern.permute.xlu0 0
    %33 = vperm.xlu0 %32, %v27
    %v34 = vpop.permute.xlu0 %33
    %vm35 = vcmp.eq.s32.totalorder %v34, %v31
    %v36 = vsel %vm35, 1, 0
    %v37 = vcvt.s32.f32 %v36
    %vm38 = vcmask 130048
    %v40 = vsel %vm38, %v37, 0
    %42 = vmatprep.subr.mxu0 0.0
    %43 = vmatpush1.msra.mxu0 %v28
    %44 = vmatprep.subr.mxu0 0.0
    %45 = vmatpush1.msra.mxu0 %v29
    %46 = vmatprep.subr.mxu0 0.0
    %47 = vmatpush1.msra.mxu0 0.0
    %48 = vmatprep.subr.mxu0 0.0
    %49 = vmatpush1.msra.mxu0 0.0
    %50 = vmatprep.subr.mxu0 0.0
    %51 = vmatpush1.msra.mxu0 0.0
    %52 = vmatprep.subr.mxu0 0.0
    %53 = vmatpush1.msra.mxu0 0.0
    %54 = vmatprep.subr.mxu0 0.0
    %55 = vmatpush1.msra.mxu0 0.0
    %56 = vmatprep.subr.mxu0 0.0
    %57 = vmatpush1.msra.mxu0 0.0
    %58 = vmatprep.subr.mxu0 0.0
    %59 = vmatpush1.msra.mxu0 0.0
    %60 = vmatprep.subr.mxu0 0.0
    %61 = vmatpush1.msra.mxu0 0.0
    %62 = vmatprep.subr.mxu0 0.0
    %63 = vmatpush1.msra.mxu0 0.0
    %64 = vmatprep.subr.mxu0 0.0
    %65 = vmatpush1.msra.mxu0 0.0
    %66 = vmatprep.subr.mxu0 0.0
    %67 = vmatpush1.msra.mxu0 0.0
    %68 = vmatprep.subr.mxu0 0.0
    %69 = vmatpush1.msra.mxu0 0.0
    %70 = vmatprep.subr.mxu0 0.0
    %71 = vmatpush1.msra.mxu0 0.0
    %72 = vmatprep.subr.mxu0 0.0
    %73 = vmatpush1.msra.mxu0 0.0
    %74 = vmatprep.subr.mxu0 0.0
    %75 = vmatpush1.msra.mxu0 0.0
    %76 = vmatprep.subr.mxu0 0.0
    %77 = vmatpush1.msra.mxu0 0.0
    %78 = vmatprep.subr.mxu0 0.0
    %79 = vmatpush1.msra.mxu0 0.0
    %80 = vmatprep.subr.mxu0 0.0
    %81 = vmatpush1.msra.mxu0 0.0
    %82 = vmatprep.subr.mxu0 0.0
    %83 = vmatpush1.msra.mxu0 0.0
    %84 = vmatprep.subr.mxu0 0.0
    %85 = vmatpush1.msra.mxu0 0.0
    %86 = vmatprep.subr.mxu0 0.0
    %87 = vmatpush1.msra.mxu0 0.0
    %88 = vmatprep.subr.mxu0 0.0
    %89 = vmatpush1.msra.mxu0 0.0
    %90 = vmatprep.subr.mxu0 0.0
    %91 = vmatpush1.msra.mxu0 0.0
    %92 = vmatprep.subr.mxu0 0.0
    %93 = vmatpush1.msra.mxu0 0.0
    %94 = vmatprep.subr.mxu0 0.0
    %95 = vmatpush1.msra.mxu0 0.0
    %96 = vmatprep.subr.mxu0 0.0
    %97 = vmatpush1.msra.mxu0 0.0
    %98 = vmatprep.subr.mxu0 0.0
    %99 = vmatpush1.msra.mxu0 0.0
    %100 = vmatprep.subr.mxu0 0.0
    %101 = vmatpush1.msra.mxu0 0.0
    %102 = vmatprep.subr.mxu0 0.0
    %103 = vmatpush1.msra.mxu0 0.0
    %104 = vmatprep.subr.mxu0 0.0
    %105 = vmatpush1.msra.mxu0 0.0
    %106 = vmatprep.mubr.f32.mxu0 0.0
    %107 = vmatmul.mubr.f32.gmra.mrb[0].mxu0 %v40
    %v108 = vpop.f32.mrb[0].mxu0
    %v109 = vadd.f32 0.0, %v108
    %v110 = vpop.f32.mrb[0].mxu0
    %111 = vdwg.mxu0
    %v112 = vmul.f32 %v26, %v26
    %vm113 = vcmask 261120
    %v114 = vsel %vm113, %v112, 0.0
    %115 = vadd.xlane.f32.xlu0 %v114
    %v116 = vpop.xlane.xlu0 %115
    %v117 = vmax.f32 %v116, 1e-24
    %v118 = vrsqrt.pop %v117
    %v119 = vmul.f32 %v26, %v118
    %v120 = vmul.f32 %v109, %v109
    %v121 = vsel %vm113, %v120, 0.0
    %122 = vadd.xlane.f32.xlu0 %v121
    %v123 = vpop.xlane.xlu0 %122
    %v124 = vmax.f32 %v123, 1e-24
    %v125 = vrsqrt.pop %v124
    %v126 = vmul.f32 %v109, %v125
    %v127 = vmul.f32 %v119, %v126
    %v128 = vsel %vm113, %v127, 0.0
    %129 = vadd.xlane.f32.xlu0 %v128
    %v130 = vpop.xlane.xlu0 %129
    %v131 = vsub.f32 1.0, %v130
    %vm132 = vcmask 7168
    %133 = vst.msk [vmem:[%s3] sm:$0xff] %vm132, %v131
    // Predicated region
    $region18: #{tpu_custom_call.1} parent=1 // pred_check
      _
    $region19: #{tpu_custom_call.1} parent=1 // pred_check_branch
      %135 = sbr.rel (0) target = $region21
    $region20: #{tpu_custom_call.1} parent=1 // pred_region
      _
    $region21: #{tpu_custom_call.1} parent=1 // pred_fallthru
      _
    // Predicated region
    $region22: #{tpu_custom_call.1} parent=1 // pred_check
      _
    $region23: #{tpu_custom_call.1} parent=1 // pred_check_branch
      %137 = sbr.rel (0) target = $region25
    $region24: #{tpu_custom_call.1} parent=1 // pred_region
      _
    $region25: #{tpu_custom_call.1} parent=1 // pred_fallthru
      _
    %138 = vsyncpa [#allocation3], 1

</llo_original>
